<compile_context>
chip_gen: v7x
topology: tpu7x:2x2x1
jax: 0.10.0
libtpu: 0.0.40
codegen_flags: <defaults>
</compile_context>

<pallas_src>
import functools

import jax
import jax.numpy as jnp
from jax import lax
from jax.experimental import pallas as pl
from jax.experimental.pallas import tpu as pltpu


GROUPS = 8            # sample groups stacked per lane column (sublane packing)
CHUNK = 512           # lanes per inner strip-mine step (bounds vreg live ranges)
MAX_TB_COLS = 32 * 1024   # max lane-columns per grid step (~256K samples/step)


def _round_up(x, m):
    return ((x + m - 1) // m) * m


def _cdiv(a, b):
    return (a + b - 1) // b


def mlp_kernel(w_ref, x_ref, o_ref):
    """Fused Linear(4,2) + ReLU + folded Linear(2,1) on one batch tile.

    w_ref: SMEM (16,) f32 flat weights:
           [w1[f,j] row-major (8), b1 (2), w23 (2), b23 (1), pad (3)]
    x_ref: VMEM (32, tb) f32 -- row f*8+g = feature f of sample-group g
    o_ref: VMEM (8, tb)  f32 -- row g     = output of sample-group g
    """
    tb = x_ref.shape[1]

    # Hoist the 13 weight scalars out of the strip-mine loop (loop-invariant).
    w1 = [[w_ref[2 * f + j] for j in range(2)] for f in range(4)]   # w1[f][j]
    b1 = [w_ref[8], w_ref[9]]
    w23 = [w_ref[10], w_ref[11]]
    b23 = w_ref[12]

    def body(c, carry):
        col = pl.multiple_of(c * CHUNK, CHUNK)
        # Four fully-dense (8, CHUNK) slabs: feature f for all 8 sample groups.
        xs = [x_ref[pl.ds(8 * f, GROUPS), pl.ds(col, CHUNK)] for f in range(4)]
        # Hidden units of Linear(4,2) + ReLU, unrolled as VPU MACs (no MXU).
        h0 = jnp.maximum(
            w1[0][0] * xs[0] + w1[1][0] * xs[1]
            + w1[2][0] * xs[2] + w1[3][0] * xs[3] + b1[0], 0.0)
        h1 = jnp.maximum(
            w1[0][1] * xs[0] + w1[1][1] * xs[1]
            + w1[2][1] * xs[2] + w1[3][1] * xs[3] + b1[1], 0.0)
        # Folded Linear(2,4)->Linear(4,1): a single (2 -> 1) linear.  Dense
        # (8, CHUNK) store -- lane- and sublane-dense.
        o_ref[:, pl.ds(col, CHUNK)] = (
            w23[0] * h0 + w23[1] * h1 + b23).astype(o_ref.dtype)
        return carry

    lax.fori_loop(0, tb // CHUNK, body, 0)


@functools.partial(jax.jit, static_argnames=("force_pallas", "max_tb_cols"))
def net_forward(x, params, *, force_pallas=False, max_tb_cols=MAX_TB_COLS):
    """x: (B, 4) float32 -> (B, 1) float32."""
    w1, b1, w2, b2, w3, b3 = params
    B = x.shape[0]

    # Tiny batches: launch/pack overhead dominates; use the fused XLA path.
    if B < GROUPS * CHUNK and not force_pallas:
        return net_forward_ref(x, params)

    # Fold the last two linears (exact; no nonlinearity between) and flatten
    # all weight scalars into a single SMEM-resident vector.
    w23 = (w2 @ w3).reshape(2)
    b23 = (b2 @ w3 + b3).reshape(1)
    wflat = jnp.concatenate([
        w1.astype(jnp.float32).reshape(8),
        b1.astype(jnp.float32).reshape(2),
        w23.astype(jnp.float32),
        b23.astype(jnp.float32),
        jnp.zeros((3,), jnp.float32),
    ])                                                   # (16,)

    # --- tiling (all static Python ints) -------------------------------------
    pack = GROUPS * CHUNK                                # padding granule: 4096
    Bp0 = _round_up(max(B, pack), pack)
    cols0 = Bp0 // GROUPS                                # multiple of CHUNK
    n_steps = _cdiv(cols0, max_tb_cols)
    tb = _round_up(_cdiv(cols0, n_steps), CHUNK)         # lane-cols per step
    cols = n_steps * tb
    Bp = cols * GROUPS

    # Pack: features on sublanes (4 features x 8 sample groups = 32 dense rows),
    # batch on lanes.  Single transpose+reshape; fused into one copy under jit.
    x_t = jnp.pad(x.astype(jnp.float32).T, ((0, 0), (0, Bp - B)))   # (4, Bp)
    x_packed = x_t.reshape(4 * GROUPS, cols)   # row f*8+g = feat f, group g

    out_packed = pl.pallas_call(
        mlp_kernel,
        out_shape=jax.ShapeDtypeStruct((GROUPS, cols), jnp.float32),
        grid_spec=pltpu.PrefetchScalarGridSpec(
            num_scalar_prefetch=1,                       # wflat -> SMEM
            grid=(n_steps,),
            in_specs=[pl.BlockSpec((4 * GROUPS, tb), lambda i, w: (0, i))],
            out_specs=pl.BlockSpec((GROUPS, tb), lambda i, w: (0, i)),
        ),
        compiler_params=pltpu.CompilerParams(
            dimension_semantics=("parallel",),
        ),
        cost_estimate=pl.CostEstimate(
            flops=22 * Bp, transcendentals=0, bytes_accessed=20 * Bp),
    )(wflat, x_packed)

    # Undo the packing: out_packed[g, c] is the output of sample g*cols + c.
    return out_packed.reshape(Bp, 1)[:B]


def init_params(key):
    """Deterministic init mimicking torch.nn.Linear default U[-1/sqrt(fan_in), +].

    Weights stored as (in_features, out_features); biases as (1, out_features).
    """
    def linear_init(k, fan_in, fan_out):
        kw, kb = jax.random.split(k)
        bound = 1.0 / jnp.sqrt(float(fan_in))
        w = jax.random.uniform(kw, (fan_in, fan_out), jnp.float32, -bound, bound)
        b = jax.random.uniform(kb, (1, fan_out), jnp.float32, -bound, bound)
        return w, b

    k1, k2, k3 = jax.random.split(key, 3)
    w1, b1 = linear_init(k1, 4, 2)   # nn.Linear(4, 2)
    w2, b2 = linear_init(k2, 2, 4)   # nn.Linear(2, 4)
    w3, b3 = linear_init(k3, 4, 1)   # nn.Linear(4, 1)
    return (w1, b1, w2, b2, w3, b3)


def net_forward_ref(x, params):
    """Pure-JAX reference for correctness checking."""
    w1, b1, w2, b2, w3, b3 = params
    h1 = jnp.maximum(x @ w1 + b1, 0.0)
    h2 = h1 @ w2 + b2
    return h2 @ w3 + b3


if __name__ == "__main__":
    key = jax.random.PRNGKey(0)
    kp, kx = jax.random.split(key)
    params = init_params(kp)

    # Small batch (as in the original test) -- force the Pallas path so the
    # kernel itself is exercised (padding to one packed tile).
    x_small = jax.random.normal(kx, (8, 4), jnp.float32)
    out_small = jax.block_until_ready(net_forward(x_small, params, force_pallas=True))
    ref_small = net_forward_ref(x_small, params)
    assert out_small.shape == (8, 1), out_small.shape
    assert jnp.allclose(out_small, ref_small, atol=1e-5, rtol=1e-5), (out_small, ref_small)

    # Larger, non-aligned batch: exercises padding + the packed-group layout.
    x_big = jax.random.normal(jax.random.PRNGKey(1), (300, 4), jnp.float32)
    out_big = jax.block_until_ready(net_forward(x_big, params, force_pallas=True))
    ref_big = net_forward_ref(x_big, params)
    assert out_big.shape == (300, 1), out_big.shape
    assert jnp.allclose(out_big, ref_big, atol=1e-5, rtol=1e-5), (out_big, ref_big)

    print("KERNEL_OK")
</pallas_src>

<mosaic_0001>
module attributes {stable_mosaic.version = 11 : i64} {
  func.func @mlp_kernel(%arg0: i32, %arg1: memref<16xf32, #tpu.memory_space<smem>>, %arg2: memref<32x512xf32, #tpu.memory_space<vmem>>, %arg3: memref<8x512xf32, #tpu.memory_space<vmem>>) attributes {dimension_semantics = [#tpu.dimension_semantics<parallel>], iteration_bounds = array<i64: 1>, scalar_prefetch = 1 : i64, scratch_operands = 0 : i64, tpu.core_type = #tpu.core_type<tc>, window_params = [{transform_indices = @transform_0, window_bounds = array<i64: 32, 512>}, {transform_indices = @transform_1, window_bounds = array<i64: 8, 512>}]} {
    %c0 = arith.constant 0 : index
    %0 = memref.load %arg1[%c0] : memref<16xf32, #tpu.memory_space<smem>>
    %c1 = arith.constant 1 : index
    %1 = memref.load %arg1[%c1] : memref<16xf32, #tpu.memory_space<smem>>
    %c2 = arith.constant 2 : index
    %2 = memref.load %arg1[%c2] : memref<16xf32, #tpu.memory_space<smem>>
    %c3 = arith.constant 3 : index
    %3 = memref.load %arg1[%c3] : memref<16xf32, #tpu.memory_space<smem>>
    %c4 = arith.constant 4 : index
    %4 = memref.load %arg1[%c4] : memref<16xf32, #tpu.memory_space<smem>>
    %c5 = arith.constant 5 : index
    %5 = memref.load %arg1[%c5] : memref<16xf32, #tpu.memory_space<smem>>
    %c6 = arith.constant 6 : index
    %6 = memref.load %arg1[%c6] : memref<16xf32, #tpu.memory_space<smem>>
    %c7 = arith.constant 7 : index
    %7 = memref.load %arg1[%c7] : memref<16xf32, #tpu.memory_space<smem>>
    %c8 = arith.constant 8 : index
    %8 = memref.load %arg1[%c8] : memref<16xf32, #tpu.memory_space<smem>>
    %c9 = arith.constant 9 : index
    %9 = memref.load %arg1[%c9] : memref<16xf32, #tpu.memory_space<smem>>
    %c10 = arith.constant 10 : index
    %10 = memref.load %arg1[%c10] : memref<16xf32, #tpu.memory_space<smem>>
    %c11 = arith.constant 11 : index
    %11 = memref.load %arg1[%c11] : memref<16xf32, #tpu.memory_space<smem>>
    %c12 = arith.constant 12 : index
    %12 = memref.load %arg1[%c12] : memref<16xf32, #tpu.memory_space<smem>>
    %c0_i32 = arith.constant 0 : i32
    %c512_i32 = arith.constant 512 : i32
    %13 = arith.muli %c0_i32, %c512_i32 : i32
    %14 = tpu.assume_multiple %13, 512 : i32
    %c0_0 = arith.constant 0 : index
    %15 = arith.index_cast %14 : i32 to index
    %16 = vector.load %arg2[%c0_0, %15] : memref<32x512xf32, #tpu.memory_space<vmem>>, vector<8x512xf32>
    %c8_1 = arith.constant 8 : index
    %17 = arith.index_cast %14 : i32 to index
    %18 = vector.load %arg2[%c8_1, %17] : memref<32x512xf32, #tpu.memory_space<vmem>>, vector<8x512xf32>
    %c16 = arith.constant 16 : index
    %19 = arith.index_cast %14 : i32 to index
    %20 = vector.load %arg2[%c16, %19] : memref<32x512xf32, #tpu.memory_space<vmem>>, vector<8x512xf32>
    %c24 = arith.constant 24 : index
    %21 = arith.index_cast %14 : i32 to index
    %22 = vector.load %arg2[%c24, %21] : memref<32x512xf32, #tpu.memory_space<vmem>>, vector<8x512xf32>
    %23 = vector.broadcast %0 : f32 to vector<8x512xf32>
    %24 = arith.mulf %23, %16 : vector<8x512xf32>
    %25 = vector.broadcast %2 : f32 to vector<8x512xf32>
    %26 = arith.mulf %25, %18 : vector<8x512xf32>
    %27 = arith.addf %24, %26 : vector<8x512xf32>
    %28 = vector.broadcast %4 : f32 to vector<8x512xf32>
    %29 = arith.mulf %28, %20 : vector<8x512xf32>
    %30 = arith.addf %27, %29 : vector<8x512xf32>
    %31 = vector.broadcast %6 : f32 to vector<8x512xf32>
    %32 = arith.mulf %31, %22 : vector<8x512xf32>
    %33 = arith.addf %30, %32 : vector<8x512xf32>
    %34 = vector.broadcast %8 : f32 to vector<8x512xf32>
    %35 = arith.addf %33, %34 : vector<8x512xf32>
    %cst = arith.constant 0.000000e+00 : f32
    %36 = vector.broadcast %cst : f32 to vector<8x512xf32>
    %37 = arith.maximumf %35, %36 : vector<8x512xf32>
    %38 = vector.broadcast %1 : f32 to vector<8x512xf32>
    %39 = arith.mulf %38, %16 : vector<8x512xf32>
    %40 = vector.broadcast %3 : f32 to vector<8x512xf32>
    %41 = arith.mulf %40, %18 : vector<8x512xf32>
    %42 = arith.addf %39, %41 : vector<8x512xf32>
    %43 = vector.broadcast %5 : f32 to vector<8x512xf32>
    %44 = arith.mulf %43, %20 : vector<8x512xf32>
    %45 = arith.addf %42, %44 : vector<8x512xf32>
    %46 = vector.broadcast %7 : f32 to vector<8x512xf32>
    %47 = arith.mulf %46, %22 : vector<8x512xf32>
    %48 = arith.addf %45, %47 : vector<8x512xf32>
    %49 = vector.broadcast %9 : f32 to vector<8x512xf32>
    %50 = arith.addf %48, %49 : vector<8x512xf32>
    %cst_2 = arith.constant 0.000000e+00 : f32
    %51 = vector.broadcast %cst_2 : f32 to vector<8x512xf32>
    %52 = arith.maximumf %50, %51 : vector<8x512xf32>
    %53 = vector.broadcast %10 : f32 to vector<8x512xf32>
    %54 = arith.mulf %53, %37 : vector<8x512xf32>
    %55 = vector.broadcast %11 : f32 to vector<8x512xf32>
    %56 = arith.mulf %55, %52 : vector<8x512xf32>
    %57 = arith.addf %54, %56 : vector<8x512xf32>
    %58 = vector.broadcast %12 : f32 to vector<8x512xf32>
    %59 = arith.addf %57, %58 : vector<8x512xf32>
    %c0_3 = arith.constant 0 : index
    %60 = arith.index_cast %14 : i32 to index
    %61 = vector.load %arg3[%c0_3, %60] : memref<8x512xf32, #tpu.memory_space<vmem>>, vector<8x512xf32>
    tpu.vector_store %arg3[%c0_3, %60], %59 {strides = array<i32>} : memref<8x512xf32, #tpu.memory_space<vmem>>, vector<8x512xf32>,
    %c1_i32 = arith.constant 1 : i32
    return
  }
  func.func @transform_0(%arg0: i32, %arg1: memref<16xf32, #tpu.memory_space<smem>>) -> (i32, i32) {
    %c0_i32 = arith.constant 0 : i32
    %c0_i32_0 = arith.constant 0 : i32
    return %c0_i32, %arg0 : i32, i32
  }
  func.func @transform_1(%arg0: i32, %arg1: memref<16xf32, #tpu.memory_space<smem>>) -> (i32, i32) {
    %c0_i32 = arith.constant 0 : i32
    %c0_i32_0 = arith.constant 0 : i32
    return %c0_i32, %arg0 : i32, i32
  }
}

</mosaic_0001>

<llo_original>
// kernel: net_forward.1
$region0: #{net_forward.1}
  #allocation0 [shape = 'u32[]', space=smem, size = 0x4, offset = 0x4, fixed_abs, tag = 'smem constant byte address 0x4 - core index']
  #allocation1 [shape = 'u32[144,128]{1,0:T(1,128)}', space=vmem, size = 0x12000, scoped, tag = 'internal scratch']
  #allocation2 [shape = 's32[1]{0}', space=sflag, size = 0x4, scoped, tag = 'scoped memory for net_forward.1']
  #allocation3 [shape = 'u8[512]{0}', space=smem, size = 0x200, scoped, tag = 'prefetched SMEM operand 0']
  %s0 = inlined_call_operand.vmem [shape: f32[16], index: 0, kind: input, shape index: {}]
  %s1 = inlined_call_operand.vmem [shape: f32[32,512], index: 1, kind: input, shape index: {}]
  %s2 = inlined_call_operand.vmem [shape: f32[8,512], index: 2, kind: output, shape index: {}]
  %s3 = sld [smem:[#allocation0]]
  $region14: #{net_forward.1} parent=0
    _
  %s5 = ssub.s32 1, %s3
  %s6 = scalar_select 0, %s5, %s3
  %s7 = sshll.u32 %s0, 4
  %s8 = int_to_ptr.vmem [resolvable:$true] %s7
  %10 = dma.vmem_to_smem %s8, 16, [#allocation3], [#allocation2]
  %11 = dma.done [#allocation2], 16
  %12 = sfence
  // Predicated region
  $region2: #{net_forward.1} parent=0 // pred_check
    _
  $region3: #{net_forward.1} parent=0 // pred_check_branch
    %14 = sbr.rel (0) target = $region5
  $region4: #{net_forward.1} parent=0 // pred_region
    _
  $region5: #{net_forward.1} parent=0 // pred_fallthru
    _
  %s15 = sld [smem:[#allocation3]]
  %s16 = sld [smem:[#allocation3 + $0x1]]
  %s17 = sld [smem:[#allocation3 + $0x2]]
  %s18 = sld [smem:[#allocation3 + $0x3]]
  %s19 = sld [smem:[#allocation3 + $0x4]]
  %s20 = sld [smem:[#allocation3 + $0x5]]
  %s21 = sld [smem:[#allocation3 + $0x6]]
  %s22 = sld [smem:[#allocation3 + $0x7]]
  %s23 = sld [smem:[#allocation3 + $0x8]]
  %s24 = sld [smem:[#allocation3 + $0x9]]
  %s25 = sld [smem:[#allocation3 + $0xa]]
  %s26 = sld [smem:[#allocation3 + $0xb]]
  %s27 = sld [smem:[#allocation3 + $0xc]]
  %v28 = vld [vmem:[%s1] sm:$0xff]
  %v29 = vld [vmem:[%s1 + $0x8] sm:$0xff]
  %v30 = vld [vmem:[%s1 + $0x10] sm:$0xff]
  %v31 = vld [vmem:[%s1 + $0x18] sm:$0xff]
  %v32 = vld [vmem:[%s1 + $0x20] sm:$0xff]
  %v33 = vld [vmem:[%s1 + $0x28] sm:$0xff]
  %v34 = vld [vmem:[%s1 + $0x30] sm:$0xff]
  %v35 = vld [vmem:[%s1 + $0x38] sm:$0xff]
  %v36 = vld [vmem:[%s1 + $0x40] sm:$0xff]
  %v37 = vld [vmem:[%s1 + $0x48] sm:$0xff]
  %v38 = vld [vmem:[%s1 + $0x50] sm:$0xff]
  %v39 = vld [vmem:[%s1 + $0x58] sm:$0xff]
  %v40 = vld [vmem:[%s1 + $0x60] sm:$0xff]
  %v41 = vld [vmem:[%s1 + $0x68] sm:$0xff]
  %v42 = vld [vmem:[%s1 + $0x70] sm:$0xff]
  %v43 = vld [vmem:[%s1 + $0x78] sm:$0xff]
  %v44 = vstv %s15
  %v45 = vmul.f32 %v44, %v28
  %v46 = vmul.f32 %v44, %v29
  %v47 = vmul.f32 %v44, %v30
  %v48 = vmul.f32 %v44, %v31
  %v49 = vstv %s17
  %v50 = vmul.f32 %v49, %v32
  %v51 = vmul.f32 %v49, %v33
  %v52 = vmul.f32 %v49, %v34
  %v53 = vmul.f32 %v49, %v35
  %v54 = vadd.f32 %v45, %v50
  %v55 = vadd.f32 %v46, %v51
  %v56 = vadd.f32 %v47, %v52
  %v57 = vadd.f32 %v48, %v53
  %v58 = vstv %s19
  %v59 = vmul.f32 %v58, %v36
  %v60 = vmul.f32 %v58, %v37
  %v61 = vmul.f32 %v58, %v38
  %v62 = vmul.f32 %v58, %v39
  %v63 = vadd.f32 %v54, %v59
  %v64 = vadd.f32 %v55, %v60
  %v65 = vadd.f32 %v56, %v61
  %v66 = vadd.f32 %v57, %v62
  %v67 = vstv %s21
  %v68 = vmul.f32 %v67, %v40
  %v69 = vmul.f32 %v67, %v41
  %v70 = vmul.f32 %v67, %v42
  %v71 = vmul.f32 %v67, %v43
  %v72 = vadd.f32 %v63, %v68
  %v73 = vadd.f32 %v64, %v69
  %v74 = vadd.f32 %v65, %v70
  %v75 = vadd.f32 %v66, %v71
  %v76 = vstv %s23
  %v77 = vadd.f32 %v72, %v76
  %v78 = vadd.f32 %v73, %v76
  %v79 = vadd.f32 %v74, %v76
  %v80 = vadd.f32 %v75, %v76
  %v81 = vmax.f32 %v77, 0.0
  %v82 = vmax.f32 %v78, 0.0
  %v83 = vmax.f32 %v79, 0.0
  %v84 = vmax.f32 %v80, 0.0
  %v85 = vstv %s16
  %v86 = vmul.f32 %v85, %v28
  %v87 = vmul.f32 %v85, %v29
  %v88 = vmul.f32 %v85, %v30
  %v89 = vmul.f32 %v85, %v31
  %v90 = vstv %s18
  %v91 = vmul.f32 %v90, %v32
  %v92 = vmul.f32 %v90, %v33
  %v93 = vmul.f32 %v90, %v34
  %v94 = vmul.f32 %v90, %v35
  %v95 = vadd.f32 %v86, %v91
  %v96 = vadd.f32 %v87, %v92
  %v97 = vadd.f32 %v88, %v93
  %v98 = vadd.f32 %v89, %v94
  %v99 = vstv %s20
  %v100 = vmul.f32 %v99, %v36
  %v101 = vmul.f32 %v99, %v37
  %v102 = vmul.f32 %v99, %v38
  %v103 = vmul.f32 %v99, %v39
  %v104 = vadd.f32 %v95, %v100
  %v105 = vadd.f32 %v96, %v101
  %v106 = vadd.f32 %v97, %v102
  %v107 = vadd.f32 %v98, %v103
  %v108 = vstv %s22
  %v109 = vmul.f32 %v108, %v40
  %v110 = vmul.f32 %v108, %v41
  %v111 = vmul.f32 %v108, %v42
  %v112 = vmul.f32 %v108, %v43
  %v113 = vadd.f32 %v104, %v109
  %v114 = vadd.f32 %v105, %v110
  %v115 = vadd.f32 %v106, %v111
  %v116 = vadd.f32 %v107, %v112
  %v117 = vstv %s24
  %v118 = vadd.f32 %v113, %v117
  %v119 = vadd.f32 %v114, %v117
  %v120 = vadd.f32 %v115, %v117
  %v121 = vadd.f32 %v116, %v117
  %v122 = vmax.f32 %v118, 0.0
  %v123 = vmax.f32 %v119, 0.0
  %v124 = vmax.f32 %v120, 0.0
  %v125 = vmax.f32 %v121, 0.0
  %v126 = vstv %s25
  %v127 = vmul.f32 %v126, %v81
  %v128 = vmul.f32 %v126, %v82
  %v129 = vmul.f32 %v126, %v83
  %v130 = vmul.f32 %v126, %v84
  %v131 = vstv %s26
  %v132 = vmul.f32 %v131, %v122
  %v133 = vmul.f32 %v131, %v123
  %v134 = vmul.f32 %v131, %v124
  %v135 = vmul.f32 %v131, %v125
  %v136 = vadd.f32 %v127, %v132
  %v137 = vadd.f32 %v128, %v133
  %v138 = vadd.f32 %v129, %v134
  %v139 = vadd.f32 %v130, %v135
  %v140 = vstv %s27
  %v141 = vadd.f32 %v136, %v140
  %v142 = vadd.f32 %v137, %v140
  %v143 = vadd.f32 %v138, %v140
  %v144 = vadd.f32 %v139, %v140
  %145 = vst [vmem:[%s2] sm:$0xff] %v141
  %146 = vst [vmem:[%s2 + $0x8] sm:$0xff] %v142
  %147 = vst [vmem:[%s2 + $0x10] sm:$0xff] %v143
  %148 = vst [vmem:[%s2 + $0x18] sm:$0xff] %v144
  // Predicated region
  $region6: #{net_forward.1} parent=0 // pred_check
    _
  $region7: #{net_forward.1} parent=0 // pred_check_branch
    %150 = sbr.rel (0) target = $region9
  $region8: #{net_forward.1} parent=0 // pred_region
    _
  $region9: #{net_forward.1} parent=0 // pred_fallthru
    _
  // Predicated region
  $region10: #{net_forward.1} parent=0 // pred_check
    _
  $region11: #{net_forward.1} parent=0 // pred_check_branch
    %152 = sbr.rel (0) target = $region13
  $region12: #{net_forward.1} parent=0 // pred_region
    _
  $region13: #{net_forward.1} parent=0 // pred_fallthru
    _

</llo_original>
